<compile_context>
chip_gen: v7x
topology: tpu7x:2x2x1
jax: 0.10.0
libtpu: 0.0.40
codegen_flags: <defaults>
</compile_context>

<pallas_src>
import numpy as np

import jax
import jax.numpy as jnp
from jax.experimental import pallas as pl
from jax.experimental.pallas import tpu as pltpu

LANES = 128
TARGET_TILE_BYTES = 4 * 1024 * 1024   # ~4 MiB per x tile (dtype-agnostic budget)
VMEM_LIMIT_BYTES = 48 * 1024 * 1024   # <= 64 MiB physical VMEM on v7x


def _drop_path_kernel(scale_ref, x_ref, o_ref):
    # scale_ref: (Bt, 1) f32; x_ref / o_ref: (Bt, TILE_F) in the input dtype.
    # Multiply in f32 (promotion), cast back on store.
    o_ref[...] = (x_ref[...] * scale_ref[...]).astype(o_ref.dtype)


def _drop_path_add_kernel(scale_ref, x_ref, sc_ref, o_ref):
    # Fused residual: o = shortcut + x * scale (one fewer HBM pass overall).
    o_ref[...] = (sc_ref[...] + x_ref[...] * scale_ref[...]).astype(o_ref.dtype)


def _pick_tiles(B, F, itemsize):
    """Pick (Bt, TILE_F): lane-dense, (8,128)-legal, ~TARGET_TILE_BYTES per tile."""
    Bt = B if B <= 8 else 8
    cols_budget = max(LANES, TARGET_TILE_BYTES // (Bt * itemsize))
    tile_cols = (cols_budget // LANES) * LANES          # multiple of 128
    TILE_F = F if F <= tile_cols else tile_cols         # full-extent F also legal
    if B > 8 and TILE_F == F:
        # Feature axis fits in one block; spend the remaining budget on batch.
        bt_budget = max(8, TARGET_TILE_BYTES // (max(TILE_F, 1) * itemsize))
        Bt = min(B, (bt_budget // 8) * 8)                # multiple of 8 (or full B)
    return Bt, TILE_F


def drop_path(x, drop_prob: float = 0.0, training: bool = False, *,
              key=None, shortcut=None, donate_x: bool = False):
    """Pallas drop_path matching the PyTorch reference semantics.

    shortcut: optional tensor of the same shape; returns shortcut + drop_path(x)
              fused in a single kernel.
    donate_x: alias the (reshaped) input buffer to the output (caller donates x).
    """
    if drop_prob == 0.0 or not training:
        return x if shortcut is None else shortcut + x

    if key is None:
        raise ValueError(
            "drop_path: an explicit PRNG key is required when training with "
            "drop_prob > 0 (a fixed default key would reuse the same mask).")

    keep_prob = 1.0 - float(drop_prob)
    B = x.shape[0]
    F = int(np.prod(x.shape[1:])) if x.ndim > 1 else 1

    # Per-sample Bernoulli(keep_prob) mask with 1/keep_prob folded in (f32),
    # same math as torch: floor(keep_prob + U[0,1)).
    u = jax.random.uniform(key, (B,), dtype=jnp.float32)
    scale = (jnp.floor(jnp.float32(keep_prob) + u)
             * jnp.float32(1.0 / keep_prob)).reshape(B, 1)

    x2 = x.reshape(B, F)
    itemsize = jnp.dtype(x.dtype).itemsize
    Bt, TILE_F = _pick_tiles(B, F, itemsize)
    grid = (pl.cdiv(B, Bt), pl.cdiv(F, TILE_F))

    x_spec = pl.BlockSpec((Bt, TILE_F), lambda i, j: (i, j))
    scale_spec = pl.BlockSpec((Bt, 1), lambda i, j: (i, 0))
    compiler_params = pltpu.CompilerParams(
        dimension_semantics=("parallel", "parallel"),
        vmem_limit_bytes=VMEM_LIMIT_BYTES)
    io_alias = {1: 0} if donate_x else {}

    if shortcut is None:
        out = pl.pallas_call(
            _drop_path_kernel,
            out_shape=jax.ShapeDtypeStruct((B, F), x.dtype),
            grid=grid,
            in_specs=[scale_spec, x_spec],
            out_specs=x_spec,
            input_output_aliases=io_alias,
            compiler_params=compiler_params,
        )(scale, x2)
    else:
        sc2 = shortcut.reshape(B, F)
        out = pl.pallas_call(
            _drop_path_add_kernel,
            out_shape=jax.ShapeDtypeStruct((B, F), x.dtype),
            grid=grid,
            in_specs=[scale_spec, x_spec, x_spec],
            out_specs=x_spec,
            input_output_aliases=io_alias,
            compiler_params=compiler_params,
        )(scale, x2, sc2)

    return out.reshape(x.shape)


class DropPath:
    """Drop paths (Stochastic Depth) per sample."""

    def __init__(self, drop_prob=None):
        self.drop_prob = drop_prob
        self.training = True

    def __call__(self, x, key=None, shortcut=None):
        p = 0.0 if self.drop_prob is None else float(self.drop_prob)
        return drop_path(x, p, self.training, key=key, shortcut=shortcut)


if __name__ == "__main__":
    key = jax.random.PRNGKey(0)
    B, C, H, W = 2, 4, 16, 16
    keep_prob = 0.7
    x = jax.random.normal(key, (B, C, H, W), dtype=jnp.float32)
    x_np = np.asarray(x)

    module = DropPath(drop_prob=0.3)

    # --- Training path (exercises the Pallas kernel). ---
    y = jax.block_until_ready(module(x, key=jax.random.PRNGKey(1234)))
    y_np = np.asarray(y)
    for b in range(B):
        is_zero = np.allclose(y_np[b], 0.0)
        is_scaled = np.allclose(y_np[b], x_np[b] / keep_prob, rtol=1e-5, atol=1e-5)
        assert is_zero or is_scaled, f"sample {b}: not a valid drop-path output"

    # --- Non-128-aligned feature size (no pad/slice HBM passes anymore). ---
    x_odd = jax.random.normal(jax.random.PRNGKey(7), (B, 3, 5, 7), dtype=jnp.float32)
    y_odd = jax.block_until_ready(
        drop_path(x_odd, 0.3, True, key=jax.random.PRNGKey(99)))
    x_odd_np, y_odd_np = np.asarray(x_odd), np.asarray(y_odd)
    for b in range(B):
        ok = (np.allclose(y_odd_np[b], 0.0) or
              np.allclose(y_odd_np[b], x_odd_np[b] / keep_prob, rtol=1e-5, atol=1e-5))
        assert ok, f"odd-shape sample {b}: not a valid drop-path output"

    # --- Fused residual path: shortcut + drop_path(x). ---
    shortcut = jax.random.normal(jax.random.PRNGKey(5), (B, C, H, W), dtype=jnp.float32)
    y_fused = jax.block_until_ready(
        module(x, key=jax.random.PRNGKey(1234), shortcut=shortcut))
    ref_fused = np.asarray(shortcut) + y_np
    assert np.allclose(np.asarray(y_fused), ref_fused, rtol=1e-5, atol=1e-5)

    # --- Eval / zero-prob path: identity. ---
    module.training = False
    y_eval = jax.block_until_ready(module(x))
    assert np.allclose(np.asarray(y_eval), x_np)

    print("KERNEL_OK")
</pallas_src>

<mosaic_0001>
module attributes {stable_mosaic.version = 11 : i64} {
  func.func @_drop_path_kernel(%arg0: i32, %arg1: i32, %arg2: memref<2x1xf32, #tpu.memory_space<vmem>>, %arg3: memref<2x1024xf32, #tpu.memory_space<vmem>>, %arg4: memref<2x1024xf32, #tpu.memory_space<vmem>>) attributes {dimension_semantics = [#tpu.dimension_semantics<parallel>, #tpu.dimension_semantics<parallel>], iteration_bounds = array<i64: 1, 1>, scalar_prefetch = 0 : i64, scratch_operands = 0 : i64, tpu.core_type = #tpu.core_type<tc>, window_params = [{transform_indices = @transform_0, window_bounds = array<i64: 2, 1>}, {transform_indices = @transform_1, window_bounds = array<i64: 2, 1024>}, {transform_indices = @transform_2, window_bounds = array<i64: 2, 1024>}]} {
    %c0 = arith.constant 0 : index
    %c0_0 = arith.constant 0 : index
    %0 = vector.load %arg3[%c0, %c0_0] : memref<2x1024xf32, #tpu.memory_space<vmem>>, vector<2x1024xf32>
    %c0_1 = arith.constant 0 : index
    %c0_2 = arith.constant 0 : index
    %1 = vector.load %arg2[%c0_1, %c0_2] : memref<2x1xf32, #tpu.memory_space<vmem>>, vector<2x1xf32>
    %2 = vector.broadcast %1 : vector<2x1xf32> to vector<2x1024xf32>
    %3 = arith.mulf %0, %2 : vector<2x1024xf32>
    %c0_3 = arith.constant 0 : index
    %c0_4 = arith.constant 0 : index
    %4 = vector.load %arg4[%c0_3, %c0_4] : memref<2x1024xf32, #tpu.memory_space<vmem>>, vector<2x1024xf32>
    tpu.vector_store %arg4[%c0_3, %c0_4], %3 {strides = array<i32>} : memref<2x1024xf32, #tpu.memory_space<vmem>>, vector<2x1024xf32>,
    return
  }
  func.func @transform_0(%arg0: i32, %arg1: i32) -> (i32, i32) {
    %c0_i32 = arith.constant 0 : i32
    %c0_i32_0 = arith.constant 0 : i32
    return %arg0, %c0_i32 : i32, i32
  }
  func.func @transform_1(%arg0: i32, %arg1: i32) -> (i32, i32) {
    %c0_i32 = arith.constant 0 : i32
    return %arg0, %arg1 : i32, i32
  }
  func.func @transform_2(%arg0: i32, %arg1: i32) -> (i32, i32) {
    %c0_i32 = arith.constant 0 : i32
    return %arg0, %arg1 : i32, i32
  }
}

</mosaic_0001>

<llo_original>
// kernel: tpu_custom_call.1
$region0: #{tpu_custom_call.1}
  #allocation0 [shape = 'u32[]', space=smem, size = 0x4, offset = 0x4, fixed_abs, tag = 'smem constant byte address 0x4 - core index']
  #allocation1 [shape = 'u32[144,128]{1,0:T(1,128)}', space=vmem, size = 0x12000, scoped, tag = 'internal scratch']
  %s0 = inlined_call_operand.vmem [shape: f32[2,1], index: 0, kind: input, shape index: {}]
  %s1 = inlined_call_operand.hbm [shape: f32[2,1024], index: 1, kind: input, shape index: {}]
  %s2 = inlined_call_operand.hbm [shape: f32[2,1024], index: 2, kind: output, shape index: {}]
  %s3 = sld [smem:[#allocation0]]
  $region22: #{tpu_custom_call.1} parent=0
    _
  %s5 = ssub.s32 1, %s3
  %s6 = scalar_select 0, %s5, %s3
  $region1: #{tpu_custom_call.1} parent=0
    #allocation2 [shape = 'u8[8192]{0}', space=vmem, size = 0x2000, scoped, tag = 'input window, operand 1, single buffered']
    #allocation3 [shape = 's32[1]{0}', space=sflag, size = 0x4, scoped, tag = 'scoped memory for tpu_custom_call.1']
    #allocation4 [shape = 's32[1]{0}', space=sflag, size = 0x4, scoped, tag = 'scoped memory for tpu_custom_call.1']
    #allocation5 [shape = 'u8[8192]{0}', space=vmem, size = 0x2000, scoped, tag = 'output window, operand 0, single buffered']
    %7 = vsyncpa [#allocation3], 0
    %8 = vsyncpa [#allocation4], 0
    // Predicated region
    $region2: #{tpu_custom_call.1} parent=1 // pred_check
      _
    $region3: #{tpu_custom_call.1} parent=1 // pred_check_branch
      %10 = sbr.rel (0) target = $region5
    $region4: #{tpu_custom_call.1} parent=1 // pred_region
      _
    $region5: #{tpu_custom_call.1} parent=1 // pred_fallthru
      _
    // Predicated region
    $region6: #{tpu_custom_call.1} parent=1 // pred_check
      _
    $region7: #{tpu_custom_call.1} parent=1 // pred_check_branch
      %12 = sbr.rel (0) target = $region9
    $region8: #{tpu_custom_call.1} parent=1 // pred_region
      %s14 = ssub.s32 256, 256
      %15 = vsyncadd [#allocation3], %s14
      %s17 = sshll.u32 [#allocation2], 4
      %s18 = int_to_ptr.vmem [resolvable:$true] %s17
      %20 = dma.hbm_to_vmem [thread:$0]  %s1, 256, %s18, [#allocation3]
    $region9: #{tpu_custom_call.1} parent=1 // pred_fallthru
      _
    // Predicated region
    $region10: #{tpu_custom_call.1} parent=1 // pred_check
      _
    $region11: #{tpu_custom_call.1} parent=1 // pred_check_branch
      %22 = sbr.rel (0) target = $region13
    $region12: #{tpu_custom_call.1} parent=1 // pred_region
      %23 = dma.done [#allocation3], 256
    $region13: #{tpu_custom_call.1} parent=1 // pred_fallthru
      _
    %v24 = vld [vmem:[#allocation2] sm:$0xff]
    %v25 = vld [vmem:[#allocation2 + $0x8] sm:$0xff]
    %v26 = vld [vmem:[%s0] sm:$0x3]
    %28 = vset.pattern.permute.xlu0 0
    %29 = vperm.xlu0 %28, %v26
    %v30 = vpop.permute.xlu0 %29
    %v32 = vunpack.c.l.s4 269488144
    %v33 = vunpack.c.0.s8 %v32
    %v34 = vlaneseq
    %v35 = vshrl.u32 %v34, 7
    %v36 = vsub.s32 %v33, %v35
    %v37 = vrot.slane %v30, %v36
    %v39 = vmul.f32 %v24, %v37
    %v40 = vmul.f32 %v25, %v37
    %41 = vst [vmem:[#allocation5] sm:$0xff] %v39
    %42 = vst [vmem:[#allocation5 + $0x8] sm:$0xff] %v40
    // Predicated region
    $region14: #{tpu_custom_call.1} parent=1 // pred_check
      _
    $region15: #{tpu_custom_call.1} parent=1 // pred_check_branch
      %44 = sbr.rel (0) target = $region17
    $region16: #{tpu_custom_call.1} parent=1 // pred_region
      %s46 = ssub.s32 256, 256
      %47 = vsyncadd [#allocation4], %s46
      %s49 = sshll.u32 [#allocation5], 4
      %s50 = int_to_ptr.vmem [resolvable:$true] %s49
      %52 = dma.vmem_to_hbm [thread:$0]  %s50, 256, %s2, [#allocation4]
    $region17: #{tpu_custom_call.1} parent=1 // pred_fallthru
      _
    // Predicated region
    $region18: #{tpu_custom_call.1} parent=1 // pred_check
      _
    $region19: #{tpu_custom_call.1} parent=1 // pred_check_branch
      %54 = sbr.rel (0) target = $region21
    $region20: #{tpu_custom_call.1} parent=1 // pred_region
      %55 = dma.done [#allocation4], 256
    $region21: #{tpu_custom_call.1} parent=1 // pred_fallthru
      _
    %56 = vsyncpa [#allocation3], 1
    %57 = vsyncpa [#allocation4], 1

</llo_original>
